<compile_context>
chip_gen: v7x
topology: tpu7x:2x2x1
jax: 0.10.0
libtpu: 0.0.40
codegen_flags: <defaults>
</compile_context>

<pallas_src>
import jax
import jax.numpy as jnp
from jax.experimental import pallas as pl
from jax.experimental.pallas import tpu as pltpu

BN_EPS = 1e-5


def mlp_head_kernel(x_ref, w1_ref, gamma_ref, beta_ref, w2_ref, o_ref):
    # ---- matmul 1: bf16 operands, f32 accumulation on the MXU ----
    h = jnp.dot(x_ref[...], w1_ref[...],
                preferred_element_type=jnp.float32)        # [B, hidden] f32

    # ---- BatchNorm1d (training mode, biased variance), one pass over h ----
    inv_b = 1.0 / x_ref.shape[0]                           # static scalar
    mean = jnp.sum(h, axis=0, keepdims=True) * inv_b       # [1, hidden]
    mean_sq = jnp.sum(h * h, axis=0, keepdims=True) * inv_b
    var = mean_sq - mean * mean
    inv_std = jax.lax.rsqrt(var + BN_EPS)                  # EUP slot (free-ish)

    # Fold affine: hn = h*scale + shift  (one fma per element)
    scale = gamma_ref[...] * inv_std                       # [1, hidden]
    shift = beta_ref[...] - mean * scale                   # [1, hidden]

    r = jnp.maximum(h * scale + shift, 0.0)                # BN + ReLU

    # ---- matmul 2: bf16 operands, f32 accumulation; lane-dense (padded) out ----
    o_ref[...] = jnp.dot(r.astype(jnp.bfloat16), w2_ref[...],
                         preferred_element_type=jnp.float32
                         ).astype(o_ref.dtype)             # [B, out_pad]


def mlp_head(x, w1_t, gamma, beta, w2_t):
    """x: [B, in_dim]; w1_t: [in_dim, hidden]; gamma/beta: [1, hidden];
    w2_t: [hidden, out_dim] -> returns [B, out_dim] (f32)."""
    B, in_dim = x.shape
    hidden = w1_t.shape[1]
    out_dim = w2_t.shape[1]

    # bf16 operands for native MXU matmuls (accumulation stays f32 in-kernel).
    x_bf = x.astype(jnp.bfloat16)
    w1_bf = w1_t.astype(jnp.bfloat16)

    # Pad the output feature dim to a multiple of 128 so the final store is
    # lane-dense (unmasked vst); padded columns multiply zero weights.
    out_pad = pl.cdiv(out_dim, 128) * 128
    w2_bf = jnp.pad(w2_t.astype(jnp.bfloat16), ((0, 0), (0, out_pad - out_dim)))

    flops = 2 * B * in_dim * hidden + 2 * B * hidden * out_pad + 8 * B * hidden
    bytes_accessed = (x_bf.size + w1_bf.size + w2_bf.size) * 2 \
        + (gamma.size + beta.size) * 4 + B * out_pad * 4

    out = pl.pallas_call(
        mlp_head_kernel,
        out_shape=jax.ShapeDtypeStruct((B, out_pad), jnp.float32),
        grid=(1,),
        in_specs=[
            pl.BlockSpec((B, in_dim), lambda i: (0, 0)),
            pl.BlockSpec((in_dim, hidden), lambda i: (0, 0)),
            pl.BlockSpec((1, hidden), lambda i: (0, 0)),
            pl.BlockSpec((1, hidden), lambda i: (0, 0)),
            pl.BlockSpec((hidden, out_pad), lambda i: (0, 0)),
        ],
        out_specs=pl.BlockSpec((B, out_pad), lambda i: (0, 0)),
        compiler_params=pltpu.CompilerParams(
            dimension_semantics=("arbitrary",)),
        cost_estimate=pl.CostEstimate(
            flops=flops, transcendentals=hidden,
            bytes_accessed=bytes_accessed),
    )(x_bf, w1_bf, gamma, beta, w2_bf)

    return out[:, :out_dim]


def reference_bf16(x, w1_t, gamma, beta, w2_t):
    """Same math as the kernel (bf16 matmul operands, f32 accumulation)."""
    h = jnp.dot(x.astype(jnp.bfloat16), w1_t.astype(jnp.bfloat16),
                preferred_element_type=jnp.float32)
    mean = h.mean(axis=0, keepdims=True)
    var = ((h - mean) ** 2).mean(axis=0, keepdims=True)
    hn = (h - mean) * jax.lax.rsqrt(var + BN_EPS) * gamma + beta
    r = jnp.maximum(hn, 0.0)
    return jnp.dot(r.astype(jnp.bfloat16), w2_t.astype(jnp.bfloat16),
                   preferred_element_type=jnp.float32)


def reference_f32(x, w1_t, gamma, beta, w2_t):
    """Full-precision forward pass of the PyTorch module (training mode)."""
    h = x @ w1_t
    mean = h.mean(axis=0, keepdims=True)
    var = ((h - mean) ** 2).mean(axis=0, keepdims=True)
    hn = (h - mean) * jax.lax.rsqrt(var + BN_EPS) * gamma + beta
    return jnp.maximum(hn, 0.0) @ w2_t


if __name__ == "__main__":
    # Small shapes consistent with MLPHead(in_dim, out_dim, hidden_dim)
    B, in_dim, hidden_dim, out_dim = 8, 32, 64, 16

    key = jax.random.PRNGKey(0)
    kx, kw1, kw2, kg, kb = jax.random.split(key, 5)

    x = jax.random.normal(kx, (B, in_dim), dtype=jnp.float32)

    # nn.Linear weights are [out, in] (bias=False in the module); pre-transpose
    # so the kernel does plain row-major matmuls.
    w1 = jax.random.normal(kw1, (hidden_dim, in_dim), jnp.float32) * (1.0 / jnp.sqrt(in_dim))
    w2 = jax.random.normal(kw2, (out_dim, hidden_dim), jnp.float32) * (1.0 / jnp.sqrt(hidden_dim))
    w1_t = w1.T                       # [in_dim, hidden]
    w2_t = w2.T                       # [hidden, out_dim]

    # BatchNorm1d affine params (default init is gamma=1/beta=0; use
    # non-trivial values to exercise the affine path).
    gamma = (1.0 + 0.5 * jax.random.normal(kg, (1, hidden_dim), jnp.float32))
    beta = 0.1 * jax.random.normal(kb, (1, hidden_dim), jnp.float32)

    out = mlp_head(x, w1_t, gamma, beta, w2_t)
    out = jax.block_until_ready(out)
    assert out.shape == (B, out_dim)

    # Tight check vs a reference using identical bf16 matmul math.
    ref_bf = reference_bf16(x, w1_t, gamma, beta, w2_t)
    assert jnp.allclose(out, ref_bf, atol=1e-2, rtol=1e-2), "mismatch vs bf16 reference"

    # Looser sanity check vs the full-f32 PyTorch-equivalent forward.
    ref_f32 = reference_f32(x, w1_t, gamma, beta, w2_t)
    assert jnp.allclose(out, ref_f32, atol=5e-2, rtol=5e-2), "mismatch vs f32 reference"

    print("KERNEL_OK")
</pallas_src>

<mosaic_0001>
module attributes {stable_mosaic.version = 11 : i64} {
  func.func @mlp_head_kernel(%arg0: i32, %arg1: memref<8x32xbf16, #tpu.memory_space<vmem>>, %arg2: memref<32x64xbf16, #tpu.memory_space<vmem>>, %arg3: memref<1x64xf32, #tpu.memory_space<vmem>>, %arg4: memref<1x64xf32, #tpu.memory_space<vmem>>, %arg5: memref<64x128xbf16, #tpu.memory_space<vmem>>, %arg6: memref<8x128xf32, #tpu.memory_space<vmem>>) attributes {dimension_semantics = [#tpu.dimension_semantics<arbitrary>], iteration_bounds = array<i64: 1>, scalar_prefetch = 0 : i64, scratch_operands = 0 : i64, tpu.core_type = #tpu.core_type<tc>, window_params = [{pipeline_mode = #tpu.pipeline_mode<synchronous>, transform_indices = @transform_0, window_bounds = array<i64: 8, 32>}, {pipeline_mode = #tpu.pipeline_mode<synchronous>, transform_indices = @transform_1, window_bounds = array<i64: 32, 64>}, {pipeline_mode = #tpu.pipeline_mode<synchronous>, transform_indices = @transform_2, window_bounds = array<i64: 1, 64>}, {pipeline_mode = #tpu.pipeline_mode<synchronous>, transform_indices = @transform_3, window_bounds = array<i64: 1, 64>}, {pipeline_mode = #tpu.pipeline_mode<synchronous>, transform_indices = @transform_4, window_bounds = array<i64: 64, 128>}, {pipeline_mode = #tpu.pipeline_mode<synchronous>, transform_indices = @transform_5, window_bounds = array<i64: 8, 128>}]} {
    %c0 = arith.constant 0 : index
    %c0_0 = arith.constant 0 : index
    %0 = vector.load %arg1[%c0, %c0_0] : memref<8x32xbf16, #tpu.memory_space<vmem>>, vector<8x32xbf16>
    %c0_1 = arith.constant 0 : index
    %c0_2 = arith.constant 0 : index
    %1 = vector.load %arg2[%c0_1, %c0_2] : memref<32x64xbf16, #tpu.memory_space<vmem>>, vector<32x64xbf16>
    %cst = arith.constant dense<0.000000e+00> : vector<8x64xf32>
    %2 = tpu.matmul %0, %1, %cst {dimension_numbers = #tpu.dot_dimension_numbers<[1], [0], [0], [1], [0, 0, 1, 1], [], []>} : vector<8x32xbf16>, vector<32x64xbf16>, vector<8x64xf32> -> vector<8x64xf32>
    %cst_3 = arith.constant dense<0.000000e+00> : vector<64xf32>
    %3 = vector.multi_reduction <add>, %2, %cst_3 [0] : vector<8x64xf32> to vector<64xf32>
    %4 = vector.shape_cast %3 : vector<64xf32> to vector<1x64xf32>
    %cst_4 = arith.constant 1.250000e-01 : f32
    %5 = vector.broadcast %cst_4 : f32 to vector<1x64xf32>
    %6 = arith.mulf %4, %5 : vector<1x64xf32>
    %7 = arith.mulf %2, %2 : vector<8x64xf32>
    %cst_5 = arith.constant dense<0.000000e+00> : vector<64xf32>
    %8 = vector.multi_reduction <add>, %7, %cst_5 [0] : vector<8x64xf32> to vector<64xf32>
    %9 = vector.shape_cast %8 : vector<64xf32> to vector<1x64xf32>
    %cst_6 = arith.constant 1.250000e-01 : f32
    %10 = vector.broadcast %cst_6 : f32 to vector<1x64xf32>
    %11 = arith.mulf %9, %10 : vector<1x64xf32>
    %12 = arith.mulf %6, %6 : vector<1x64xf32>
    %13 = arith.subf %11, %12 : vector<1x64xf32>
    %cst_7 = arith.constant 9.99999974E-6 : f32
    %14 = vector.broadcast %cst_7 : f32 to vector<1x64xf32>
    %15 = arith.addf %13, %14 : vector<1x64xf32>
    %16 = math.rsqrt %15 : vector<1x64xf32>
    %c0_8 = arith.constant 0 : index
    %c0_9 = arith.constant 0 : index
    %17 = vector.load %arg3[%c0_8, %c0_9] : memref<1x64xf32, #tpu.memory_space<vmem>>, vector<1x64xf32>
    %18 = arith.mulf %17, %16 : vector<1x64xf32>
    %c0_10 = arith.constant 0 : index
    %c0_11 = arith.constant 0 : index
    %19 = vector.load %arg4[%c0_10, %c0_11] : memref<1x64xf32, #tpu.memory_space<vmem>>, vector<1x64xf32>
    %20 = arith.mulf %6, %18 : vector<1x64xf32>
    %21 = arith.subf %19, %20 : vector<1x64xf32>
    %22 = vector.broadcast %18 : vector<1x64xf32> to vector<8x64xf32>
    %23 = arith.mulf %2, %22 : vector<8x64xf32>
    %24 = vector.broadcast %21 : vector<1x64xf32> to vector<8x64xf32>
    %25 = arith.addf %23, %24 : vector<8x64xf32>
    %cst_12 = arith.constant 0.000000e+00 : f32
    %26 = vector.broadcast %cst_12 : f32 to vector<8x64xf32>
    %27 = arith.maximumf %25, %26 : vector<8x64xf32>
    %28 = arith.truncf %27 : vector<8x64xf32> to vector<8x64xbf16>
    %c0_13 = arith.constant 0 : index
    %c0_14 = arith.constant 0 : index
    %29 = vector.load %arg5[%c0_13, %c0_14] : memref<64x128xbf16, #tpu.memory_space<vmem>>, vector<64x128xbf16>
    %cst_15 = arith.constant dense<0.000000e+00> : vector<8x128xf32>
    %30 = tpu.matmul %28, %29, %cst_15 {dimension_numbers = #tpu.dot_dimension_numbers<[1], [0], [0], [1], [0, 0, 1, 1], [], []>} : vector<8x64xbf16>, vector<64x128xbf16>, vector<8x128xf32> -> vector<8x128xf32>
    %c0_16 = arith.constant 0 : index
    %c0_17 = arith.constant 0 : index
    %31 = vector.load %arg6[%c0_16, %c0_17] : memref<8x128xf32, #tpu.memory_space<vmem>>, vector<8x128xf32>
    tpu.vector_store %arg6[%c0_16, %c0_17], %30 {strides = array<i32>} : memref<8x128xf32, #tpu.memory_space<vmem>>, vector<8x128xf32>,
    return
  }
  func.func @transform_0(%arg0: i32) -> (i32, i32) {
    %c0_i32 = arith.constant 0 : i32
    %c0_i32_0 = arith.constant 0 : i32
    %c0_i32_1 = arith.constant 0 : i32
    return %c0_i32, %c0_i32_0 : i32, i32
  }
  func.func @transform_1(%arg0: i32) -> (i32, i32) {
    %c0_i32 = arith.constant 0 : i32
    %c0_i32_0 = arith.constant 0 : i32
    %c0_i32_1 = arith.constant 0 : i32
    return %c0_i32, %c0_i32_0 : i32, i32
  }
  func.func @transform_2(%arg0: i32) -> (i32, i32) {
    %c0_i32 = arith.constant 0 : i32
    %c0_i32_0 = arith.constant 0 : i32
    %c0_i32_1 = arith.constant 0 : i32
    return %c0_i32, %c0_i32_0 : i32, i32
  }
  func.func @transform_3(%arg0: i32) -> (i32, i32) {
    %c0_i32 = arith.constant 0 : i32
    %c0_i32_0 = arith.constant 0 : i32
    %c0_i32_1 = arith.constant 0 : i32
    return %c0_i32, %c0_i32_0 : i32, i32
  }
  func.func @transform_4(%arg0: i32) -> (i32, i32) {
    %c0_i32 = arith.constant 0 : i32
    %c0_i32_0 = arith.constant 0 : i32
    %c0_i32_1 = arith.constant 0 : i32
    return %c0_i32, %c0_i32_0 : i32, i32
  }
  func.func @transform_5(%arg0: i32) -> (i32, i32) {
    %c0_i32 = arith.constant 0 : i32
    %c0_i32_0 = arith.constant 0 : i32
    %c0_i32_1 = arith.constant 0 : i32
    return %c0_i32, %c0_i32_0 : i32, i32
  }
}

</mosaic_0001>

<llo_original>
// kernel: tpu_custom_call.1
$region0: #{tpu_custom_call.1}
  #allocation0 [shape = 'u32[]', space=smem, size = 0x4, offset = 0x4, fixed_abs, tag = 'smem constant byte address 0x4 - core index']
  #allocation1 [shape = 'u32[144,128]{1,0:T(1,128)}', space=vmem, size = 0x12000, scoped, tag = 'internal scratch']
  %s0 = inlined_call_operand.hbm [shape: bf16[8,32], index: 0, kind: input, shape index: {}]
  %s1 = inlined_call_operand.hbm [shape: bf16[32,64], index: 1, kind: input, shape index: {}]
  %s2 = inlined_call_operand.vmem [shape: f32[1,64], index: 2, kind: input, shape index: {}]
  %s3 = inlined_call_operand.vmem [shape: f32[1,64], index: 3, kind: input, shape index: {}]
  %s4 = inlined_call_operand.hbm [shape: bf16[64,128], index: 4, kind: input, shape index: {}]
  %s5 = inlined_call_operand.hbm [shape: f32[8,128], index: 5, kind: output, shape index: {}]
  %s6 = sld [smem:[#allocation0]]
  $region42: #{tpu_custom_call.1} parent=0
    _
  %s8 = ssub.s32 1, %s6
  %s9 = scalar_select 0, %s8, %s6
  $region1: #{tpu_custom_call.1} parent=0
    #allocation2 [shape = 'u8[2048]{0}', space=vmem, size = 0x800, scoped, tag = 'input window, operand 0, single buffered']
    #allocation3 [shape = 's32[1]{0}', space=sflag, size = 0x4, scoped, tag = 'scoped memory for tpu_custom_call.1']
    #allocation4 [shape = 's32[1]{0}', space=sflag, size = 0x4, scoped, tag = 'scoped memory for tpu_custom_call.1']
    #allocation5 [shape = 'u8[8192]{0}', space=vmem, size = 0x2000, scoped, tag = 'input window, operand 1, single buffered']
    #allocation6 [shape = 's32[1]{0}', space=sflag, size = 0x4, scoped, tag = 'scoped memory for tpu_custom_call.1']
    #allocation7 [shape = 'u8[16384]{0}', space=vmem, size = 0x4000, scoped, tag = 'input window, operand 4, single buffered']
    #allocation8 [shape = 'u8[4096]{0}', space=vmem, size = 0x1000, scoped, tag = 'output window, operand 0, single buffered']
    %10 = vsyncpa [#allocation3], 0
    %11 = vsyncpa [#allocation6], 0
    %12 = vsyncpa [#allocation4], 0
    // Predicated region
    $region2: #{tpu_custom_call.1} parent=1 // pred_check
      _
    $region3: #{tpu_custom_call.1} parent=1 // pred_check_branch
      %14 = sbr.rel (0) target = $region5
    $region4: #{tpu_custom_call.1} parent=1 // pred_region
      %s16 = ssub.s32 64, 64
      %17 = vsyncadd [#allocation3], %s16
      %s19 = sshll.u32 [#allocation2], 4
      %s20 = int_to_ptr.vmem [resolvable:$true] %s19
      %22 = dma.hbm_to_vmem [thread:$0]  %s0, 64, %s20, [#allocation3]
    $region5: #{tpu_custom_call.1} parent=1 // pred_fallthru
      _
    // Predicated region
    $region6: #{tpu_custom_call.1} parent=1 // pred_check
      _
    $region7: #{tpu_custom_call.1} parent=1 // pred_check_branch
      %24 = sbr.rel (0) target = $region9
    $region8: #{tpu_custom_call.1} parent=1 // pred_region
      %s26 = ssub.s32 256, 256
      %27 = vsyncadd [#allocation6], %s26
      %s28 = sshll.u32 [#allocation5], 4
      %s29 = int_to_ptr.vmem [resolvable:$true] %s28
      %34 = dma.hbm_to_vmem [thread:$0]  %s1, 256, %s29, [#allocation6], 64, 64, 4
    $region9: #{tpu_custom_call.1} parent=1 // pred_fallthru
      _
    // Predicated region
    $region10: #{tpu_custom_call.1} parent=1 // pred_check
      _
    $region11: #{tpu_custom_call.1} parent=1 // pred_check_branch
      %36 = sbr.rel (0) target = $region13
    $region12: #{tpu_custom_call.1} parent=1 // pred_region
      _
    $region13: #{tpu_custom_call.1} parent=1 // pred_fallthru
      _
    // Predicated region
    $region14: #{tpu_custom_call.1} parent=1 // pred_check
      _
    $region15: #{tpu_custom_call.1} parent=1 // pred_check_branch
      %38 = sbr.rel (0) target = $region17
    $region16: #{tpu_custom_call.1} parent=1 // pred_region
      _
    $region17: #{tpu_custom_call.1} parent=1 // pred_fallthru
      _
    // Predicated region
    $region18: #{tpu_custom_call.1} parent=1 // pred_check
      _
    $region19: #{tpu_custom_call.1} parent=1 // pred_check_branch
      %40 = sbr.rel (0) target = $region21
    $region20: #{tpu_custom_call.1} parent=1 // pred_region
      %s42 = ssub.s32 512, 512
      %43 = vsyncadd [#allocation6], %s42
      %s44 = sshll.u32 [#allocation7], 4
      %s45 = int_to_ptr.vmem [resolvable:$true] %s44
      %50 = dma.hbm_to_vmem [thread:$0]  %s4, 512, %s45, [#allocation6], 64, 64, 4
    $region21: #{tpu_custom_call.1} parent=1 // pred_fallthru
      _
    // Predicated region
    $region22: #{tpu_custom_call.1} parent=1 // pred_check
      _
    $region23: #{tpu_custom_call.1} parent=1 // pred_check_branch
      %52 = sbr.rel (0) target = $region25
    $region24: #{tpu_custom_call.1} parent=1 // pred_region
      %53 = dma.done [#allocation3], 64
    $region25: #{tpu_custom_call.1} parent=1 // pred_fallthru
      _
    // Predicated region
    $region26: #{tpu_custom_call.1} parent=1 // pred_check
      _
    $region27: #{tpu_custom_call.1} parent=1 // pred_check_branch
      %55 = sbr.rel (0) target = $region29
    $region28: #{tpu_custom_call.1} parent=1 // pred_region
      %56 = dma.done [#allocation6], 256
    $region29: #{tpu_custom_call.1} parent=1 // pred_fallthru
      _
    // Predicated region
    $region30: #{tpu_custom_call.1} parent=1 // pred_check
      _
    $region31: #{tpu_custom_call.1} parent=1 // pred_check_branch
      %58 = sbr.rel (0) target = $region33
    $region32: #{tpu_custom_call.1} parent=1 // pred_region
      %59 = dma.done [#allocation6], 512
    $region33: #{tpu_custom_call.1} parent=1 // pred_fallthru
      _
    %v61 = vld [vmem:[#allocation2] sm:$0xf]
    %v62 = vld [vmem:[#allocation5] sm:$0xf]
    %v63 = vld [vmem:[#allocation5 + $0x4] sm:$0xf]
    %v64 = vld [vmem:[#allocation5 + $0x8] sm:$0xf]
    %v65 = vld [vmem:[#allocation5 + $0xc] sm:$0xf]
    %v70 = vunpack.c.l.b16 %v62
    %v71 = vunpack.c.l.b16 %v63
    %v72 = vunpack.c.l.b16 %v64
    %v73 = vunpack.c.l.b16 %v65
    %v74 = vpack.c.b16 %v71, %v70
    %v75 = vpack.c.b16 %v73, %v72
    %vm78 = vcmask 261120
    %v80 = vsel %vm78, %v61, 0
    %82 = vmatprep.subr.bf16.mxu0 0
    %83 = vmatpush1.bf16.msra.mxu0 %v74
    %84 = vmatprep.subr.bf16.mxu0 0
    %85 = vmatpush1.bf16.msra.mxu0 %v75
    %86 = vmatprep.subr.bf16.mxu0 0
    %87 = vmatpush1.bf16.msra.mxu0 0
    %88 = vmatprep.subr.bf16.mxu0 0
    %89 = vmatpush1.bf16.msra.mxu0 0
    %90 = vmatprep.subr.bf16.mxu0 0
    %91 = vmatpush1.bf16.msra.mxu0 0
    %92 = vmatprep.subr.bf16.mxu0 0
    %93 = vmatpush1.bf16.msra.mxu0 0
    %94 = vmatprep.subr.bf16.mxu0 0
    %95 = vmatpush1.bf16.msra.mxu0 0
    %96 = vmatprep.subr.bf16.mxu0 0
    %97 = vmatpush1.bf16.msra.mxu0 0
    %98 = vmatprep.subr.bf16.mxu0 0
    %99 = vmatpush1.bf16.msra.mxu0 0
    %100 = vmatprep.subr.bf16.mxu0 0
    %101 = vmatpush1.bf16.msra.mxu0 0
    %102 = vmatprep.subr.bf16.mxu0 0
    %103 = vmatpush1.bf16.msra.mxu0 0
    %104 = vmatprep.subr.bf16.mxu0 0
    %105 = vmatpush1.bf16.msra.mxu0 0
    %106 = vmatprep.subr.bf16.mxu0 0
    %107 = vmatpush1.bf16.msra.mxu0 0
    %108 = vmatprep.subr.bf16.mxu0 0
    %109 = vmatpush1.bf16.msra.mxu0 0
    %110 = vmatprep.subr.bf16.mxu0 0
    %111 = vmatpush1.bf16.msra.mxu0 0
    %112 = vmatprep.subr.bf16.mxu0 0
    %113 = vmatpush1.bf16.msra.mxu0 0
    %114 = vmatprep.mubr.bf16.mxu0 0
    %115 = vmatmul.mubr.bf16.gmra.mrb[0].mxu0 %v80
    %v116 = vpop.f32.mrb[0].mxu0
    %v117 = vadd.f32 0.0, %v116
    %v118 = vpop.f32.mrb[0].mxu0
    %v119 = vpop.f32.mrb[0].mxu0
    %v120 = vpop.f32.mrb[0].mxu0
    %121 = vdwg.mxu0
    %vm122 = vcmask 523264
    %v123 = vsel %vm122, %v117, 0.0
    %v124 = vrot.slane %v123, 4
    %v125 = vadd.f32 %v123, %v124
    %v126 = vrot.slane %v125, 2
    %v127 = vadd.f32 %v125, %v126
    %v128 = vrot.slane %v127, 1
    %v129 = vadd.f32 %v127, %v128
    %v130 = vmul.f32 %v129, 0.125
    %v131 = vmul.f32 %v117, %v117
    %v132 = vsel %vm122, %v131, 0.0
    %v133 = vrot.slane %v132, 4
    %v134 = vadd.f32 %v132, %v133
    %v135 = vrot.slane %v134, 2
    %v136 = vadd.f32 %v134, %v135
    %v137 = vrot.slane %v136, 1
    %v138 = vadd.f32 %v136, %v137
    %v139 = vmul.f32 %v138, 0.125
    %v140 = vmul.f32 %v130, %v130
    %v141 = vsub.f32 %v139, %v140
    %v142 = vadd.f32 %v141, 1e-05
    %v143 = vrsqrt.pop %v142
    %v144 = vld [vmem:[%s2] sm:$0x1]
    %v145 = vmul.f32 %v144, %v143
    %v146 = vld [vmem:[%s3] sm:$0x1]
    %v147 = vmul.f32 %v130, %v145
    %v148 = vsub.f32 %v146, %v147
    %v150 = vlaneseq
    %v151 = vshrl.u32 %v150, 7
    %v152 = vsub.s32 0, %v151
    %v153 = vrot.slane %v145, %v152
    %v155 = vmul.f32 %v117, %v153
    %v157 = vlaneseq
    %v158 = vshrl.u32 %v157, 7
    %v159 = vsub.s32 0, %v158
    %v160 = vrot.slane %v148, %v159
    %v162 = vadd.f32 %v155, %v160
    %v163 = vmax.f32 %v162, 0.0
    %v164 = vpack.c.bf16 %v163, %v163
    %v165 = vld [vmem:[#allocation7] sm:$0xf]
    %v166 = vld [vmem:[#allocation7 + $0x4] sm:$0xf]
    %v167 = vld [vmem:[#allocation7 + $0x8] sm:$0xf]
    %v168 = vld [vmem:[#allocation7 + $0xc] sm:$0xf]
    %v169 = vld [vmem:[#allocation7 + $0x10] sm:$0xf]
    %v170 = vld [vmem:[#allocation7 + $0x14] sm:$0xf]
    %v171 = vld [vmem:[#allocation7 + $0x18] sm:$0xf]
    %v172 = vld [vmem:[#allocation7 + $0x1c] sm:$0xf]
    %v181 = vunpack.c.l.b16 %v165
    %v182 = vunpack.c.l.b16 %v166
    %v183 = vunpack.c.l.b16 %v167
    %v184 = vunpack.c.l.b16 %v168
    %v185 = vunpack.c.l.b16 %v169
    %v186 = vunpack.c.l.b16 %v170
    %v187 = vunpack.c.l.b16 %v171
    %v188 = vunpack.c.l.b16 %v172
    %v189 = vpack.c.b16 %v182, %v181
    %v190 = vpack.c.b16 %v184, %v183
    %v191 = vpack.c.b16 %v186, %v185
    %v192 = vpack.c.b16 %v188, %v187
    %v198 = vsel %vm122, %v164, 0
    %200 = vmatprep.subr.bf16.mxu0 0
    %201 = vmatpush1.bf16.msra.mxu0 %v189
    %202 = vmatprep.subr.bf16.mxu0 0
    %203 = vmatpush1.bf16.msra.mxu0 %v190
    %204 = vmatprep.subr.bf16.mxu0 0
    %205 = vmatpush1.bf16.msra.mxu0 %v191
    %206 = vmatprep.subr.bf16.mxu0 0
    %207 = vmatpush1.bf16.msra.mxu0 %v192
    %208 = vmatprep.subr.bf16.mxu0 0
    %209 = vmatpush1.bf16.msra.mxu0 0
    %210 = vmatprep.subr.bf16.mxu0 0
    %211 = vmatpush1.bf16.msra.mxu0 0
    %212 = vmatprep.subr.bf16.mxu0 0
    %213 = vmatpush1.bf16.msra.mxu0 0
    %214 = vmatprep.subr.bf16.mxu0 0
    %215 = vmatpush1.bf16.msra.mxu0 0
    %216 = vmatprep.subr.bf16.mxu0 0
    %217 = vmatpush1.bf16.msra.mxu0 0
    %218 = vmatprep.subr.bf16.mxu0 0
    %219 = vmatpush1.bf16.msra.mxu0 0
    %220 = vmatprep.subr.bf16.mxu0 0
    %221 = vmatpush1.bf16.msra.mxu0 0
    %222 = vmatprep.subr.bf16.mxu0 0
    %223 = vmatpush1.bf16.msra.mxu0 0
    %224 = vmatprep.subr.bf16.mxu0 0
    %225 = vmatpush1.bf16.msra.mxu0 0
    %226 = vmatprep.subr.bf16.mxu0 0
    %227 = vmatpush1.bf16.msra.mxu0 0
    %228 = vmatprep.subr.bf16.mxu0 0
    %229 = vmatpush1.bf16.msra.mxu0 0
    %230 = vmatprep.subr.bf16.mxu0 0
    %231 = vmatpush1.bf16.msra.mxu0 0
    %232 = vmatprep.mubr.bf16.mxu0 0
    %233 = vmatmul.mubr.bf16.gmra.mrb[0].mxu0 %v198
    %v234 = vpop.f32.mrb[0].mxu0
    %v235 = vadd.f32 0.0, %v234
    %v236 = vpop.f32.mrb[0].mxu0
    %v237 = vpop.f32.mrb[0].mxu0
    %v238 = vpop.f32.mrb[0].mxu0
    %239 = vdwg.mxu0
    %240 = vst [vmem:[#allocation8] sm:$0xff] %v235
    // Predicated region
    $region34: #{tpu_custom_call.1} parent=1 // pred_check
      _
    $region35: #{tpu_custom_call.1} parent=1 // pred_check_branch
      %242 = sbr.rel (0) target = $region37
    $region36: #{tpu_custom_call.1} parent=1 // pred_region
      %s244 = ssub.s32 128, 128
      %245 = vsyncadd [#allocation4], %s244
      %s247 = sshll.u32 [#allocation8], 4
      %s248 = int_to_ptr.vmem [resolvable:$true] %s247
      %250 = dma.vmem_to_hbm [thread:$0]  %s248, 128, %s5, [#allocation4]
    $region37: #{tpu_custom_call.1} parent=1 // pred_fallthru
      _
    // Predicated region
    $region38: #{tpu_custom_call.1} parent=1 // pred_check
      _
    $region39: #{tpu_custom_call.1} parent=1 // pred_check_branch
      %252 = sbr.rel (0) target = $region41
    $region40: #{tpu_custom_call.1} parent=1 // pred_region
      %253 = dma.done [#allocation4], 128
    $region41: #{tpu_custom_call.1} parent=1 // pred_fallthru
      _
    %254 = vsyncpa [#allocation3], 1
    %255 = vsyncpa [#allocation6], 1
    %256 = vsyncpa [#allocation4], 1

</llo_original>
